<compile_context>
chip_gen: v5e
topology: v5e:2x2
jax: 0.10.0
libtpu: 0.0.40
codegen_flags: <defaults>
</compile_context>

<pallas_src>
import functools

import jax
import jax.numpy as jnp
from jax.experimental import pallas as pl
from jax.experimental.pallas import tpu as pltpu  # noqa: F401  (kept for TPU-specific tuning)


def _attention2_kernel(k_ref, q_ref, ml_ref,
                       wk_w_ref, wk_b_ref,
                       wq_w_ref, wq_b_ref,
                       proj_w_ref, proj_b_ref,
                       out_ref, attn_ref,
                       *, mb, k_len, q_len, hidden):
    f32 = jnp.float32
    bf16 = jnp.bfloat16

    # Fused projections over the whole batch: (mb*len, E) @ (E, H) on the MXU.
    kx = jnp.dot(k_ref[...].astype(bf16), wk_w_ref[...],
                 preferred_element_type=f32) + wk_b_ref[...]
    # `weight` already folded into wq in the wrapper:
    #   qw = q @ (Wq @ weight) + (bq @ weight)
    qw = jnp.dot(q_ref[...].astype(bf16), wq_w_ref[...],
                 preferred_element_type=f32) + wq_b_ref[...]

    kx3 = kx.reshape(mb, k_len, hidden)     # sublane-aligned splits (multiples of 8)
    qw3 = qw.reshape(mb, q_len, hidden)

    # score = tanh(qw @ kx^T); transpose folded into the contraction dims.
    score = jnp.tanh(
        jnp.einsum('bqh,bkh->bqk', qw3.astype(bf16), kx3.astype(bf16),
                   preferred_element_type=f32))

    # Masked softmax over the key axis (== softmax -> mask -> renormalize).
    col = jax.lax.broadcasted_iota(jnp.int32, (mb, q_len, k_len), 2)
    valid = col < ml_ref[...]                          # (mb,1,1) broadcast
    score = jnp.where(valid, score, f32(-1e30))
    m = jnp.max(score, axis=-1, keepdims=True)
    e = jnp.where(valid, jnp.exp(score - m), f32(0.0))
    s = jnp.sum(e, axis=-1, keepdims=True)
    inv = pl.reciprocal(jnp.maximum(s, f32(1e-30)), approx=True)   # EUP slot
    attn = e * inv                                     # (mb, q_len, k_len) f32
    attn_ref[...] = attn.astype(attn_ref.dtype)

    # Context + output projection (proj weight zero-padded to lane-dense width).
    ctx = jnp.einsum('bqk,bkh->bqh', attn.astype(bf16), kx3.astype(bf16),
                     preferred_element_type=f32)
    ctx2 = ctx.reshape(mb * q_len, hidden)
    out = jnp.dot(ctx2.astype(bf16), proj_w_ref[...],
                  preferred_element_type=f32) + proj_b_ref[...]
    out_ref[...] = out.astype(out_ref.dtype)


def attention2_forward(k, q, memory_len, params):
    """Pallas implementation of Attention2.forward (n_head = 1, eval mode).

    k: (mb, k_len, E) or (mb, E); q: (mb, q_len, E) or (mb, E)
    memory_len: (mb,) int
    Returns (output (mb, q_len, E), attentions (mb, q_len, k_len)).
    """
    if q.ndim == 2:
        q = q[:, None, :]
    if k.ndim == 2:
        k = k[:, None, :]
    mb, k_len, E = k.shape
    q_len = q.shape[1]
    H = params["weight"].shape[0]
    E_pad = ((E + 127) // 128) * 128          # lane-dense output projection

    f32 = jnp.float32
    bf16 = jnp.bfloat16

    # ---- wrapper-side weight prep (cheap, once per call) ----
    wk_w = params["wk_w"].astype(bf16)                                   # (E, H)
    wk_b = params["wk_b"].reshape(1, H).astype(f32)
    wqf_w = jnp.dot(params["wq_w"], params["weight"]).astype(bf16)       # (E, H) fused
    wqf_b = jnp.dot(params["wq_b"].reshape(1, H), params["weight"]).astype(f32)
    proj_w = jnp.pad(params["proj_w"], ((0, 0), (0, E_pad - E))).astype(bf16)      # (H, E_pad)
    proj_b = jnp.pad(params["proj_b"].reshape(1, E), ((0, 0), (0, E_pad - E))).astype(f32)

    k2 = k.reshape(mb * k_len, E).astype(f32)
    q2 = q.reshape(mb * q_len, E).astype(f32)
    ml = memory_len.astype(jnp.int32).reshape(mb, 1, 1)

    kernel = functools.partial(_attention2_kernel,
                               mb=mb, k_len=k_len, q_len=q_len, hidden=H)

    # Single invocation, whole batch resident in VMEM (shapes are tiny).
    out_flat, attn = pl.pallas_call(
        kernel,
        out_shape=(
            jax.ShapeDtypeStruct((mb * q_len, E_pad), f32),
            jax.ShapeDtypeStruct((mb, q_len, k_len), f32),
        ),
    )(k2, q2, ml, wk_w, wk_b, wqf_w, wqf_b, proj_w, proj_b)

    # TODO(synk): nn.Dropout is identity in eval mode; training-time dropout not modeled.
    output = out_flat[:, :E].reshape(mb, q_len, E)
    return output, attn


def init_params(key, embed_dim, hidden_dim):
    ks = jax.random.split(key, 7)
    s_lin = 1.0 / jnp.sqrt(embed_dim)
    s_proj = 1.0 / jnp.sqrt(hidden_dim)
    return {
        "wk_w": jax.random.uniform(ks[0], (embed_dim, hidden_dim), jnp.float32, -s_lin, s_lin),
        "wk_b": jax.random.uniform(ks[1], (hidden_dim,), jnp.float32, -s_lin, s_lin),
        "wq_w": jax.random.uniform(ks[2], (embed_dim, hidden_dim), jnp.float32, -s_lin, s_lin),
        "wq_b": jax.random.uniform(ks[3], (hidden_dim,), jnp.float32, -s_lin, s_lin),
        "proj_w": jax.random.uniform(ks[4], (hidden_dim, embed_dim), jnp.float32, -s_proj, s_proj),
        "proj_b": jax.random.uniform(ks[5], (embed_dim,), jnp.float32, -s_proj, s_proj),
        # self.weight is an uninitialized nn.Parameter in the PyTorch module;
        # initialize deterministically here.
        "weight": jax.random.normal(ks[6], (hidden_dim, hidden_dim), jnp.float32) * 0.05,
    }


if __name__ == "__main__":
    embed_dim = 32
    hidden_dim = 32      # n_head = 1 -> hidden_dim = embed_dim // n_head
    mb, k_len, q_len = 2, 16, 8

    key = jax.random.PRNGKey(0)
    kp, kk, kq = jax.random.split(key, 3)
    params = init_params(kp, embed_dim, hidden_dim)

    k = jax.random.normal(kk, (mb, k_len, embed_dim), jnp.float32)
    q = jax.random.normal(kq, (mb, q_len, embed_dim), jnp.float32)
    memory_len = jnp.array([10, 16], dtype=jnp.int32)

    out, attn = attention2_forward(k, q, memory_len, params)
    jax.block_until_ready((out, attn))

    assert out.shape == (mb, q_len, embed_dim)
    assert attn.shape == (mb, q_len, k_len)
    assert bool(jnp.all(jnp.isfinite(out)))
    assert bool(jnp.all(jnp.isfinite(attn)))
    # masked key positions (>= memory_len[b]) carry exactly zero attention
    assert bool(jnp.all(attn[0, :, 10:] == 0.0))
    # rows renormalize to ~1 (approx reciprocal tolerance)
    assert bool(jnp.all(jnp.abs(jnp.sum(attn, axis=-1) - 1.0) < 1e-2))
    print("KERNEL_OK")
</pallas_src>

<mosaic_0001>
module attributes {stable_mosaic.version = 11 : i64} {
  func.func @_attention2_kernel(%arg0: memref<32x32xf32, #tpu.memory_space<vmem>>, %arg1: memref<16x32xf32, #tpu.memory_space<vmem>>, %arg2: memref<2x1x1xi32, #tpu.memory_space<vmem>>, %arg3: memref<32x32xbf16, #tpu.memory_space<vmem>>, %arg4: memref<1x32xf32, #tpu.memory_space<vmem>>, %arg5: memref<32x32xbf16, #tpu.memory_space<vmem>>, %arg6: memref<1x32xf32, #tpu.memory_space<vmem>>, %arg7: memref<32x128xbf16, #tpu.memory_space<vmem>>, %arg8: memref<1x128xf32, #tpu.memory_space<vmem>>, %arg9: memref<16x128xf32, #tpu.memory_space<vmem>>, %arg10: memref<2x8x16xf32, #tpu.memory_space<vmem>>) attributes {dimension_semantics = [], scalar_prefetch = 0 : i64, scratch_operands = 0 : i64, tpu.core_type = #tpu.core_type<tc>} {
    %c0 = arith.constant 0 : index
    %c0_0 = arith.constant 0 : index
    %0 = vector.load %arg0[%c0, %c0_0] : memref<32x32xf32, #tpu.memory_space<vmem>>, vector<32x32xf32>
    %1 = arith.truncf %0 : vector<32x32xf32> to vector<32x32xbf16>
    %c0_1 = arith.constant 0 : index
    %c0_2 = arith.constant 0 : index
    %2 = vector.load %arg3[%c0_1, %c0_2] : memref<32x32xbf16, #tpu.memory_space<vmem>>, vector<32x32xbf16>
    %cst = arith.constant dense<0.000000e+00> : vector<32x32xf32>
    %3 = tpu.matmul %1, %2, %cst {dimension_numbers = #tpu.dot_dimension_numbers<[1], [0], [0], [1], [0, 0, 1, 1], [], []>} : vector<32x32xbf16>, vector<32x32xbf16>, vector<32x32xf32> -> vector<32x32xf32>
    %c0_3 = arith.constant 0 : index
    %c0_4 = arith.constant 0 : index
    %4 = vector.load %arg4[%c0_3, %c0_4] : memref<1x32xf32, #tpu.memory_space<vmem>>, vector<1x32xf32>
    %5 = vector.broadcast %4 : vector<1x32xf32> to vector<32x32xf32>
    %6 = arith.addf %3, %5 : vector<32x32xf32>
    %c0_5 = arith.constant 0 : index
    %c0_6 = arith.constant 0 : index
    %7 = vector.load %arg1[%c0_5, %c0_6] : memref<16x32xf32, #tpu.memory_space<vmem>>, vector<16x32xf32>
    %8 = arith.truncf %7 : vector<16x32xf32> to vector<16x32xbf16>
    %c0_7 = arith.constant 0 : index
    %c0_8 = arith.constant 0 : index
    %9 = vector.load %arg5[%c0_7, %c0_8] : memref<32x32xbf16, #tpu.memory_space<vmem>>, vector<32x32xbf16>
    %cst_9 = arith.constant dense<0.000000e+00> : vector<16x32xf32>
    %10 = tpu.matmul %8, %9, %cst_9 {dimension_numbers = #tpu.dot_dimension_numbers<[1], [0], [0], [1], [0, 0, 1, 1], [], []>} : vector<16x32xbf16>, vector<32x32xbf16>, vector<16x32xf32> -> vector<16x32xf32>
    %c0_10 = arith.constant 0 : index
    %c0_11 = arith.constant 0 : index
    %11 = vector.load %arg6[%c0_10, %c0_11] : memref<1x32xf32, #tpu.memory_space<vmem>>, vector<1x32xf32>
    %12 = vector.broadcast %11 : vector<1x32xf32> to vector<16x32xf32>
    %13 = arith.addf %10, %12 : vector<16x32xf32>
    %14 = vector.shape_cast %6 : vector<32x32xf32> to vector<2x16x32xf32>
    %15 = vector.shape_cast %13 : vector<16x32xf32> to vector<2x8x32xf32>
    %16 = arith.truncf %15 : vector<2x8x32xf32> to vector<2x8x32xbf16>
    %17 = arith.truncf %14 : vector<2x16x32xf32> to vector<2x16x32xbf16>
    "tpu.trace_start"() <{level = 10 : i32, message = "bqh,bkh->bqk"}> : () -> ()
    %cst_12 = arith.constant dense<0.000000e+00> : vector<2x8x16xf32>
    %18 = tpu.matmul %16, %17, %cst_12 {dimension_numbers = #tpu.dot_dimension_numbers<[2], [2], [1], [1], [0, 0, 0, 1, 1, 1], [0], [0]>} : vector<2x8x32xbf16>, vector<2x16x32xbf16>, vector<2x8x16xf32> -> vector<2x8x16xf32>
    "tpu.trace_stop"() : () -> ()
    %19 = math.tanh %18 : vector<2x8x16xf32>
    %20 = tpu.iota {dimensions = array<i32: 2>} : vector<2x8x16xi32>
    %c0_13 = arith.constant 0 : index
    %c0_14 = arith.constant 0 : index
    %c0_15 = arith.constant 0 : index
    %21 = vector.load %arg2[%c0_13, %c0_14, %c0_15] : memref<2x1x1xi32, #tpu.memory_space<vmem>>, vector<2x1x1xi32>
    %22 = vector.broadcast %21 : vector<2x1x1xi32> to vector<2x8x16xi32>
    %23 = arith.cmpi slt, %20, %22 : vector<2x8x16xi32>
    %cst_16 = arith.constant -1.000000e+30 : f32
    %24 = vector.broadcast %cst_16 : f32 to vector<2x8x16xf32>
    %25 = arith.select %23, %19, %24 : vector<2x8x16xi1>, vector<2x8x16xf32>
    %cst_17 = arith.constant dense<0xFF800000> : vector<2x8xf32>
    %26 = vector.multi_reduction <maximumf>, %25, %cst_17 [2] : vector<2x8x16xf32> to vector<2x8xf32>
    %27 = vector.shape_cast %26 : vector<2x8xf32> to vector<2x8x1xf32>
    %28 = vector.broadcast %27 : vector<2x8x1xf32> to vector<2x8x16xf32>
    %29 = arith.subf %25, %28 : vector<2x8x16xf32>
    %30 = math.exp %29 : vector<2x8x16xf32>
    %cst_18 = arith.constant 0.000000e+00 : f32
    %31 = vector.broadcast %cst_18 : f32 to vector<2x8x16xf32>
    %32 = arith.select %23, %30, %31 : vector<2x8x16xi1>, vector<2x8x16xf32>
    %cst_19 = arith.constant dense<0.000000e+00> : vector<2x8xf32>
    %33 = vector.multi_reduction <add>, %32, %cst_19 [2] : vector<2x8x16xf32> to vector<2x8xf32>
    %34 = vector.shape_cast %33 : vector<2x8xf32> to vector<2x8x1xf32>
    %cst_20 = arith.constant 1.000000e-30 : f32
    %35 = vector.broadcast %cst_20 : f32 to vector<2x8x1xf32>
    %36 = arith.maximumf %34, %35 : vector<2x8x1xf32>
    %37 = tpu.reciprocal %36 {approx = true} : vector<2x8x1xf32> -> vector<2x8x1xf32>
    %38 = vector.broadcast %37 : vector<2x8x1xf32> to vector<2x8x16xf32>
    %39 = arith.mulf %32, %38 : vector<2x8x16xf32>
    %c0_21 = arith.constant 0 : index
    %c0_22 = arith.constant 0 : index
    %c0_23 = arith.constant 0 : index
    %40 = vector.load %arg10[%c0_21, %c0_22, %c0_23] : memref<2x8x16xf32, #tpu.memory_space<vmem>>, vector<2x8x16xf32>
    tpu.vector_store %arg10[%c0_21, %c0_22, %c0_23], %39 {strides = array<i32>} : memref<2x8x16xf32, #tpu.memory_space<vmem>>, vector<2x8x16xf32>,
    %41 = arith.truncf %39 : vector<2x8x16xf32> to vector<2x8x16xbf16>
    %42 = arith.truncf %14 : vector<2x16x32xf32> to vector<2x16x32xbf16>
    "tpu.trace_start"() <{level = 10 : i32, message = "bqk,bkh->bqh"}> : () -> ()
    %cst_24 = arith.constant dense<0.000000e+00> : vector<2x8x32xf32>
    %43 = tpu.matmul %41, %42, %cst_24 {dimension_numbers = #tpu.dot_dimension_numbers<[2], [1], [1], [2], [0, 0, 0, 1, 1, 2], [0], [0]>} : vector<2x8x16xbf16>, vector<2x16x32xbf16>, vector<2x8x32xf32> -> vector<2x8x32xf32>
    "tpu.trace_stop"() : () -> ()
    %44 = vector.shape_cast %43 : vector<2x8x32xf32> to vector<16x32xf32>
    %45 = arith.truncf %44 : vector<16x32xf32> to vector<16x32xbf16>
    %c0_25 = arith.constant 0 : index
    %c0_26 = arith.constant 0 : index
    %46 = vector.load %arg7[%c0_25, %c0_26] : memref<32x128xbf16, #tpu.memory_space<vmem>>, vector<32x128xbf16>
    %cst_27 = arith.constant dense<0.000000e+00> : vector<16x128xf32>
    %47 = tpu.matmul %45, %46, %cst_27 {dimension_numbers = #tpu.dot_dimension_numbers<[1], [0], [0], [1], [0, 0, 1, 1], [], []>} : vector<16x32xbf16>, vector<32x128xbf16>, vector<16x128xf32> -> vector<16x128xf32>
    %c0_28 = arith.constant 0 : index
    %c0_29 = arith.constant 0 : index
    %48 = vector.load %arg8[%c0_28, %c0_29] : memref<1x128xf32, #tpu.memory_space<vmem>>, vector<1x128xf32>
    %49 = vector.broadcast %48 : vector<1x128xf32> to vector<16x128xf32>
    %50 = arith.addf %47, %49 : vector<16x128xf32>
    %c0_30 = arith.constant 0 : index
    %c0_31 = arith.constant 0 : index
    %51 = vector.load %arg9[%c0_30, %c0_31] : memref<16x128xf32, #tpu.memory_space<vmem>>, vector<16x128xf32>
    tpu.vector_store %arg9[%c0_30, %c0_31], %50 {strides = array<i32>} : memref<16x128xf32, #tpu.memory_space<vmem>>, vector<16x128xf32>,
    return
  }
}

</mosaic_0001>

<llo_original>
// kernel: tpu_custom_call.1
$region0: #{tpu_custom_call.1}
  #allocation0 [shape = 'u32[]', space=smem, size = 0x4, offset = 0x4, fixed_abs, tag = 'smem constant byte address 0x4 - core index']
  #allocation1 [shape = 'u32[72,128]{1,0:T(1,128)}', space=vmem, size = 0x9000, scoped, tag = 'internal scratch']
  %s0 = inlined_call_operand.hbm [shape: f32[32,32], index: 0, kind: input, shape index: {}]
  %s1 = inlined_call_operand.hbm [shape: f32[16,32], index: 1, kind: input, shape index: {}]
  %s2 = inlined_call_operand.vmem [shape: s32[2,1,1], index: 2, kind: input, shape index: {}]
  %s3 = inlined_call_operand.hbm [shape: bf16[32,32], index: 3, kind: input, shape index: {}]
  %s4 = inlined_call_operand.vmem [shape: f32[1,32], index: 4, kind: input, shape index: {}]
  %s5 = inlined_call_operand.hbm [shape: bf16[32,32], index: 5, kind: input, shape index: {}]
  %s6 = inlined_call_operand.vmem [shape: f32[1,32], index: 6, kind: input, shape index: {}]
  %s7 = inlined_call_operand.hbm [shape: bf16[32,128], index: 7, kind: input, shape index: {}]
  %s8 = inlined_call_operand.vmem [shape: f32[1,128], index: 8, kind: input, shape index: {}]
  %s9 = inlined_call_operand.hbm [shape: f32[16,128], index: 9, kind: output, shape index: {0}]
  %s10 = inlined_call_operand.hbm [shape: f32[2,8,16], index: 10, kind: output, shape index: {1}]
  %11 = xla_tuple %s9, %s10
  %s12 = sld [smem:[#allocation0]]
  $region74: #{tpu_custom_call.1} parent=0
    _
  %s14 = ssub.s32 1, %s12
  %s15 = scalar_select 0, %s14, %s12
  $region1: #{tpu_custom_call.1} parent=0
    #allocation2 [shape = 'u8[16384]{0}', space=vmem, size = 0x4000, scoped, tag = 'input window, operand 0, single buffered']
    #allocation3 [shape = 's32[1]{0}', space=sflag, size = 0x4, scoped, tag = 'scoped memory for tpu_custom_call.1']
    #allocation4 [shape = 's32[1]{0}', space=sflag, size = 0x4, scoped, tag = 'scoped memory for tpu_custom_call.1']
    #allocation5 [shape = 'u8[8192]{0}', space=vmem, size = 0x2000, scoped, tag = 'input window, operand 1, single buffered']
    #allocation6 [shape = 's32[1]{0}', space=sflag, size = 0x4, scoped, tag = 'scoped memory for tpu_custom_call.1']
    #allocation7 [shape = 'u8[8192]{0}', space=vmem, size = 0x2000, scoped, tag = 'input window, operand 3, single buffered']
    #allocation8 [shape = 'u8[8192]{0}', space=vmem, size = 0x2000, scoped, tag = 'input window, operand 5, single buffered']
    #allocation9 [shape = 's32[1]{0}', space=sflag, size = 0x4, scoped, tag = 'scoped memory for tpu_custom_call.1']
    #allocation10 [shape = 'u8[8192]{0}', space=vmem, size = 0x2000, scoped, tag = 'input window, operand 7, single buffered']
    #allocation11 [shape = 'u8[8192]{0}', space=vmem, size = 0x2000, scoped, tag = 'output window, operand 0, single buffered']
    #allocation12 [shape = 'u8[8192]{0}', space=vmem, size = 0x2000, scoped, tag = 'output window, operand 1, single buffered']
    #allocation13 [shape = 's32[1]{0}', space=sflag, size = 0x4, scoped, tag = 'scoped memory for tpu_custom_call.1']
    %16 = vsyncpa [#allocation3], 0
    %17 = vsyncpa [#allocation6], 0
    %18 = vsyncpa [#allocation9], 0
    %19 = vsyncpa [#allocation4], 0
    %20 = vsyncpa [#allocation13], 0
    // Predicated region
    $region2: #{tpu_custom_call.1} parent=1 // pred_check
      _
    $region3: #{tpu_custom_call.1} parent=1 // pred_check_branch
      %22 = sbr.rel (0) target = $region5
    $region4: #{tpu_custom_call.1} parent=1 // pred_region
      %24 = vsyncadd [#allocation3], 0
      %s25 = sshll.u32 %s0, 4
      %s26 = int_to_ptr.hbm [resolvable:$true] %s25
      %s27 = sshll.u32 [#allocation2], 4
      %s28 = int_to_ptr.vmem [resolvable:$true] %s27
      %33 = dma.hbm_to_vmem [thread:$0]  %s26, 512, %s28, [#allocation3], 128, 128, 8
    $region5: #{tpu_custom_call.1} parent=1 // pred_fallthru
      _
    // Predicated region
    $region6: #{tpu_custom_call.1} parent=1 // pred_check
      _
    $region7: #{tpu_custom_call.1} parent=1 // pred_check_branch
      %35 = sbr.rel (0) target = $region9
    $region8: #{tpu_custom_call.1} parent=1 // pred_region
      %37 = vsyncadd [#allocation6], 0
      %s38 = sshll.u32 %s1, 4
      %s39 = int_to_ptr.hbm [resolvable:$true] %s38
      %s40 = sshll.u32 [#allocation5], 4
      %s41 = int_to_ptr.vmem [resolvable:$true] %s40
      %46 = dma.hbm_to_vmem [thread:$0]  %s39, 256, %s41, [#allocation6], 128, 128, 8
    $region9: #{tpu_custom_call.1} parent=1 // pred_fallthru
      _
    // Predicated region
    $region10: #{tpu_custom_call.1} parent=1 // pred_check
      _
    $region11: #{tpu_custom_call.1} parent=1 // pred_check_branch
      %48 = sbr.rel (0) target = $region13
    $region12: #{tpu_custom_call.1} parent=1 // pred_region
      _
    $region13: #{tpu_custom_call.1} parent=1 // pred_fallthru
      _
    // Predicated region
    $region14: #{tpu_custom_call.1} parent=1 // pred_check
      _
    $region15: #{tpu_custom_call.1} parent=1 // pred_check_branch
      %50 = sbr.rel (0) target = $region17
    $region16: #{tpu_custom_call.1} parent=1 // pred_region
      %52 = vsyncadd [#allocation6], 0
      %s53 = sshll.u32 %s3, 4
      %s54 = int_to_ptr.hbm [resolvable:$true] %s53
      %s55 = sshll.u32 [#allocation7], 4
      %s56 = int_to_ptr.vmem [resolvable:$true] %s55
      %61 = dma.hbm_to_vmem [thread:$0]  %s54, 256, %s56, [#allocation6], 64, 64, 4
    $region17: #{tpu_custom_call.1} parent=1 // pred_fallthru
      _
    // Predicated region
    $region18: #{tpu_custom_call.1} parent=1 // pred_check
      _
    $region19: #{tpu_custom_call.1} parent=1 // pred_check_branch
      %63 = sbr.rel (0) target = $region21
    $region20: #{tpu_custom_call.1} parent=1 // pred_region
      _
    $region21: #{tpu_custom_call.1} parent=1 // pred_fallthru
      _
    // Predicated region
    $region22: #{tpu_custom_call.1} parent=1 // pred_check
      _
    $region23: #{tpu_custom_call.1} parent=1 // pred_check_branch
      %65 = sbr.rel (0) target = $region25
    $region24: #{tpu_custom_call.1} parent=1 // pred_region
      %67 = vsyncadd [#allocation9], 0
      %s68 = sshll.u32 %s5, 4
      %s69 = int_to_ptr.hbm [resolvable:$true] %s68
      %s70 = sshll.u32 [#allocation8], 4
      %s71 = int_to_ptr.vmem [resolvable:$true] %s70
      %76 = dma.hbm_to_vmem [thread:$0]  %s69, 256, %s71, [#allocation9], 64, 64, 4
    $region25: #{tpu_custom_call.1} parent=1 // pred_fallthru
      _
    // Predicated region
    $region26: #{tpu_custom_call.1} parent=1 // pred_check
      _
    $region27: #{tpu_custom_call.1} parent=1 // pred_check_branch
      %78 = sbr.rel (0) target = $region29
    $region28: #{tpu_custom_call.1} parent=1 // pred_region
      _
    $region29: #{tpu_custom_call.1} parent=1 // pred_fallthru
      _
    // Predicated region
    $region30: #{tpu_custom_call.1} parent=1 // pred_check
      _
    $region31: #{tpu_custom_call.1} parent=1 // pred_check_branch
      %80 = sbr.rel (0) target = $region33
    $region32: #{tpu_custom_call.1} parent=1 // pred_region
      %82 = vsyncadd [#allocation9], 0
      %s83 = sshll.u32 %s7, 4
      %s84 = int_to_ptr.hbm [resolvable:$true] %s83
      %s85 = sshll.u32 [#allocation10], 4
      %s86 = int_to_ptr.vmem [resolvable:$true] %s85
      %91 = dma.hbm_to_vmem [thread:$0]  %s84, 256, %s86, [#allocation9], 64, 64, 4
    $region33: #{tpu_custom_call.1} parent=1 // pred_fallthru
      _
    // Predicated region
    $region34: #{tpu_custom_call.1} parent=1 // pred_check
      _
    $region35: #{tpu_custom_call.1} parent=1 // pred_check_branch
      %93 = sbr.rel (0) target = $region37
    $region36: #{tpu_custom_call.1} parent=1 // pred_region
      _
    $region37: #{tpu_custom_call.1} parent=1 // pred_fallthru
      _
    // Predicated region
    $region38: #{tpu_custom_call.1} parent=1 // pred_check
      _
    $region39: #{tpu_custom_call.1} parent=1 // pred_check_branch
      %95 = sbr.rel (0) target = $region41
    $region40: #{tpu_custom_call.1} parent=1 // pred_region
      %97 = dma.done [#allocation3], 512
    $region41: #{tpu_custom_call.1} parent=1 // pred_fallthru
      _
    // Predicated region
    $region42: #{tpu_custom_call.1} parent=1 // pred_check
      _
    $region43: #{tpu_custom_call.1} parent=1 // pred_check_branch
      %99 = sbr.rel (0) target = $region45
    $region44: #{tpu_custom_call.1} parent=1 // pred_region
      %101 = dma.done [#allocation6], 256
    $region45: #{tpu_custom_call.1} parent=1 // pred_fallthru
      _
    // Predicated region
    $region46: #{tpu_custom_call.1} parent=1 // pred_check
      _
    $region47: #{tpu_custom_call.1} parent=1 // pred_check_branch
      %103 = sbr.rel (0) target = $region49
    $region48: #{tpu_custom_call.1} parent=1 // pred_region
      %105 = dma.done [#allocation6], 256
    $region49: #{tpu_custom_call.1} parent=1 // pred_fallthru
      _
    // Predicated region
    $region50: #{tpu_custom_call.1} parent=1 // pred_check
      _
    $region51: #{tpu_custom_call.1} parent=1 // pred_check_branch
      %107 = sbr.rel (0) target = $region53
    $region52: #{tpu_custom_call.1} parent=1 // pred_region
      %109 = dma.done [#allocation9], 256
    $region53: #{tpu_custom_call.1} parent=1 // pred_fallthru
      _
    // Predicated region
    $region54: #{tpu_custom_call.1} parent=1 // pred_check
      _
    $region55: #{tpu_custom_call.1} parent=1 // pred_check_branch
      %111 = sbr.rel (0) target = $region57
    $region56: #{tpu_custom_call.1} parent=1 // pred_region
      %113 = dma.done [#allocation9], 256
    $region57: #{tpu_custom_call.1} parent=1 // pred_fallthru
      _
    %v115 = vld [vmem:[#allocation2] sm:$0xff]
    %v116 = vld [vmem:[#allocation2 + $0x8] sm:$0xff]
    %v117 = vld [vmem:[#allocation2 + $0x10] sm:$0xff]
    %v118 = vld [vmem:[#allocation2 + $0x18] sm:$0xff]
    %v119 = vpack.c.bf16 %v116, %v115
    %v120 = vpack.c.bf16 %v118, %v117
    %v121 = vld [vmem:[#allocation7] sm:$0xf]
    %v122 = vld [vmem:[#allocation7 + $0x4] sm:$0xf]
    %v123 = vld [vmem:[#allocation7 + $0x8] sm:$0xf]
    %v124 = vld [vmem:[#allocation7 + $0xc] sm:$0xf]
    %v125 = vld [vmem:[%s4] sm:$0x1]
    %v127 = vperm.slane %v125, 0
    %v133 = vunpack.c.l.b16 %v121
    %v134 = vunpack.c.l.b16 %v122
    %v135 = vunpack.c.l.b16 %v123
    %v136 = vunpack.c.l.b16 %v124
    %v137 = vpack.c.b16 %v134, %v133
    %v138 = vpack.c.b16 %v136, %v135
    %vm141 = vcmask 261120
    %v143 = vsel %vm141, %v119, 0
    %v146 = vsel %vm141, %v120, 0
    %148 = vmatpush.bf16.msra.mxu0 0
    %149 = vmatpush.bf16.msra.mxu0 0
    %150 = vmatpush.bf16.msra.mxu0 0
    %151 = vmatpush.bf16.msra.mxu0 0
    %152 = vmatpush.bf16.msra.mxu0 0
    %153 = vmatpush.bf16.msra.mxu0 0
    %154 = vmatpush.bf16.msra.mxu0 %v138
    %155 = vmatpush.bf16.msra.mxu0 %v137
    %156 = vmatmul.bf16.gmra.mxu0 %v143
    %v157 = vpop.f32.mrf.mxu0
    %v158 = vadd.f32 %v127, %v157
    %v159 = vpop.f32.mrf.mxu0
    %v160 = vadd.f32 %v127, %v159
    %161 = vmatmul.bf16.gmra.mxu0 %v146
    %v162 = vpop.f32.mrf.mxu0
    %v163 = vadd.f32 %v127, %v162
    %v164 = vpop.f32.mrf.mxu0
    %v165 = vadd.f32 %v127, %v164
    %166 = vdwg.mxu0
    %v167 = vld [vmem:[#allocation5] sm:$0xff]
    %v168 = vld [vmem:[#allocation5 + $0x8] sm:$0xff]
    %v169 = vpack.c.bf16 %v168, %v167
    %v170 = vld [vmem:[#allocation8] sm:$0xf]
    %v171 = vld [vmem:[#allocation8 + $0x4] sm:$0xf]
    %v172 = vld [vmem:[#allocation8 + $0x8] sm:$0xf]
    %v173 = vld [vmem:[#allocation8 + $0xc] sm:$0xf]
    %v174 = vld [vmem:[%s6] sm:$0x1]
    %v176 = vperm.slane %v174, 0
    %v182 = vunpack.c.l.b16 %v170
    %v183 = vunpack.c.l.b16 %v171
    %v184 = vunpack.c.l.b16 %v172
    %v185 = vunpack.c.l.b16 %v173
    %v186 = vpack.c.b16 %v183, %v182
    %v187 = vpack.c.b16 %v185, %v184
    %v191 = vsel %vm141, %v169, 0
    %193 = vmatpush.bf16.msra.mxu0 0
    %194 = vmatpush.bf16.msra.mxu0 0
    %195 = vmatpush.bf16.msra.mxu0 0
    %196 = vmatpush.bf16.msra.mxu0 0
    %197 = vmatpush.bf16.msra.mxu0 0
    %198 = vmatpush.bf16.msra.mxu0 0
    %199 = vmatpush.bf16.msra.mxu0 %v187
    %200 = vmatpush.bf16.msra.mxu0 %v186
    %201 = vmatmul.bf16.gmra.mxu0 %v191
    %v202 = vpop.f32.mrf.mxu0
    %v203 = vadd.f32 %v176, %v202
    %v204 = vpop.f32.mrf.mxu0
    %v205 = vadd.f32 %v176, %v204
    %206 = vdwg.mxu0
    %v207 = vpack.c.bf16 %v203, %v203
    %v208 = vpack.c.bf16 %v205, %v205
    %v209 = vpack.c.bf16 %v158, %v158
    %v210 = vpack.c.bf16 %v160, %v160
    %v211 = vpack.c.bf16 %v163, %v163
    %v212 = vpack.c.bf16 %v165, %v165
    %v215 = vunpack.c.l.b16 %v209
    %v216 = vunpack.c.l.b16 %v210
    %v217 = vpack.c.b16 %v216, %v215
    %v219 = vsel %vm141, %v207, 0
    %v222 = vsel %vm141, %v217, 0
    %224 = vmatpush.bf16.xpose.msra.mxu0 0
    %225 = vmatpush.bf16.xpose.msra.mxu0 0
    %226 = vmatpush.bf16.xpose.msra.mxu0 0
    %227 = vmatpush.bf16.xpose.msra.mxu0 0
    %228 = vmatpush.bf16.xpose.msra.mxu0 0
    %229 = vmatpush.bf16.xpose.msra.mxu0 0
    %230 = vmatpush.bf16.xpose.msra.mxu0 0
    %231 = vmatpush.bf16.xpose.msra.mxu0 %v222
    %232 = vmatmul.bf16.gmra.mxu0 %v219
    %v233 = vpop.f32.mrf.mxu0
    %v234 = vadd.f32 0.0, %v233
    %v235 = vpop.f32.mrf.mxu0
    %236 = vdwg.mxu0
    %v239 = vunpack.c.l.b16 %v211
    %v240 = vunpack.c.l.b16 %v212
    %v241 = vpack.c.b16 %v240, %v239
    %v243 = vsel %vm141, %v208, 0
    %v246 = vsel %vm141, %v241, 0
    %248 = vmatpush.bf16.xpose.msra.mxu0 0
    %249 = vmatpush.bf16.xpose.msra.mxu0 0
    %250 = vmatpush.bf16.xpose.msra.mxu0 0
    %251 = vmatpush.bf16.xpose.msra.mxu0 0
    %252 = vmatpush.bf16.xpose.msra.mxu0 0
    %253 = vmatpush.bf16.xpose.msra.mxu0 0
    %254 = vmatpush.bf16.xpose.msra.mxu0 0
    %255 = vmatpush.bf16.xpose.msra.mxu0 %v246
    %256 = vmatmul.bf16.gmra.mxu0 %v243
    %v257 = vpop.f32.mrf.mxu0
    %v258 = vadd.f32 0.0, %v257
    %v259 = vpop.f32.mrf.mxu0
    %260 = vdwg.mxu0
    %v261 = vtanh.pop %v234
    %v262 = vtanh.pop %v258
    %v263 = vlaneseq
    %v264 = vand.u32 %v263, 127
    %v265 = vld [vmem:[%s2] sm:$0x1]
    %v266 = vld [vmem:[%s2 + $0x1] sm:$0x1]
    %v267 = vperm.slane %v265, 0
    %v268 = vperm.slane %v266, 0
    %269 = vset.pattern.permute.xlu0 0
    %270 = vperm.xlu0 %269, %v267
    %v271 = vpop.permute.xlu0 %270
    %272 = vset.pattern.permute.xlu0 0
    %273 = vperm.xlu0 %272, %v268
    %v274 = vpop.permute.xlu0 %273
    %vm275 = vcmp.lt.s32.totalorder %v264, %v271
    %vm276 = vcmp.lt.s32.totalorder %v264, %v274
    %v277 = vsel %vm275, %v261, -1e+30
    %v278 = vsel %vm276, %v262, -1e+30
    %vm279 = vcmask 130048
    %v280 = vsel %vm279, %v277, -inf
    %281 = vmax.xlane.f32.xlu0 %v280
    %v282 = vpop.xlane.xlu0 %281
    %v283 = vsel %vm279, %v278, -inf
    %284 = vmax.xlane.f32.xlu0 %v283
    %v285 = vpop.xlane.xlu0 %284
    %v286 = vsub.f32 %v277, %v282
    %v287 = vsub.f32 %v278, %v285
    %v288 = vmul.f32 %v286, 1.442695
    %v289 = vpow.pop %v288
    %v290 = vmul.f32 %v287, 1.442695
    %v291 = vpow.pop %v290
    %v292 = vsel %vm275, %v289, 0.0
    %v293 = vsel %vm276, %v291, 0.0
    %v294 = vsel %vm279, %v292, 0.0
    %295 = vadd.xlane.f32.xlu0 %v294
    %v296 = vpop.xlane.xlu0 %295
    %v297 = vsel %vm279, %v293, 0.0
    %298 = vadd.xlane.f32.xlu0 %v297
    %v299 = vpop.xlane.xlu0 %298
    %v300 = vmax.f32 %v296, 1e-30
    %v301 = vmax.f32 %v299, 1e-30
    %v302 = vrcp.pop %v300
    %v303 = vrcp.pop %v301
    %v304 = vmul.f32 %v292, %v302
    %v305 = vmul.f32 %v293, %v303
    %306 = vst.msk [vmem:[#allocation12] sm:$0xff] %vm279, %v304
    %307 = vst.msk [vmem:[#allocation12 + $0x8] sm:$0xff] %vm279, %v305
    %v308 = vpack.c.bf16 %v304, %v304
    %v309 = vpack.c.bf16 %v305, %v305
    %v312 = vsel %vm279, %v308, 0
    %314 = vmatpush.bf16.msra.mxu0 0
    %315 = vmatpush.bf16.msra.mxu0 0
    %316 = vmatpush.bf16.msra.mxu0 0
    %317 = vmatpush.bf16.msra.mxu0 0
    %318 = vmatpush.bf16.msra.mxu0 0
    %319 = vmatpush.bf16.msra.mxu0 0
    %320 = vmatpush.bf16.msra.mxu0 0
    %321 = vmatpush.bf16.msra.mxu0 %v217
    %322 = vmatmul.bf16.gmra.mxu0 %v312
    %v323 = vpop.f32.mrf.mxu0
    %v324 = vadd.f32 0.0, %v323
    %v325 = vpop.f32.mrf.mxu0
    %326 = vdwg.mxu0
    %v329 = vsel %vm279, %v309, 0
    %331 = vmatpush.bf16.msra.mxu0 0
    %332 = vmatpush.bf16.msra.mxu0 0
    %333 = vmatpush.bf16.msra.mxu0 0
    %334 = vmatpush.bf16.msra.mxu0 0
    %335 = vmatpush.bf16.msra.mxu0 0
    %336 = vmatpush.bf16.msra.mxu0 0
    %337 = vmatpush.bf16.msra.mxu0 0
    %338 = vmatpush.bf16.msra.mxu0 %v241
    %339 = vmatmul.bf16.gmra.mxu0 %v329
    %v340 = vpop.f32.mrf.mxu0
    %v341 = vadd.f32 0.0, %v340
    %v342 = vpop.f32.mrf.mxu0
    %343 = vdwg.mxu0
    %v344 = vpack.c.bf16 %v341, %v324
    %v345 = vld [vmem:[#allocation10] sm:$0xf]
    %v346 = vld [vmem:[#allocation10 + $0x4] sm:$0xf]
    %v347 = vld [vmem:[#allocation10 + $0x8] sm:$0xf]
    %v348 = vld [vmem:[#allocation10 + $0xc] sm:$0xf]
    %v349 = vld [vmem:[%s8] sm:$0x1]
    %v351 = vperm.slane %v349, 0
    %v357 = vunpack.c.l.b16 %v345
    %v358 = vunpack.c.l.b16 %v346
    %v359 = vunpack.c.l.b16 %v347
    %v360 = vunpack.c.l.b16 %v348
    %v361 = vpack.c.b16 %v358, %v357
    %v362 = vpack.c.b16 %v360, %v359
    %v366 = vsel %vm141, %v344, 0
    %368 = vmatpush.bf16.msra.mxu0 0
    %369 = vmatpush.bf16.msra.mxu0 0
    %370 = vmatpush.bf16.msra.mxu0 0
    %371 = vmatpush.bf16.msra.mxu0 0
    %372 = vmatpush.bf16.msra.mxu0 0
    %373 = vmatpush.bf16.msra.mxu0 0
    %374 = vmatpush.bf16.msra.mxu0 %v362
    %375 = vmatpush.bf16.msra.mxu0 %v361
    %376 = vmatmul.bf16.gmra.mxu0 %v366
    %v377 = vpop.f32.mrf.mxu0
    %v378 = vadd.f32 %v351, %v377
    %v379 = vpop.f32.mrf.mxu0
    %v380 = vadd.f32 %v351, %v379
    %381 = vdwg.mxu0
    %382 = vst [vmem:[#allocation11] sm:$0xff] %v378
    %383 = vst [vmem:[#allocation11 + $0x8] sm:$0xff] %v380
    // Predicated region
    $region58: #{tpu_custom_call.1} parent=1 // pred_check
      _
    $region59: #{tpu_custom_call.1} parent=1 // pred_check_branch
      %385 = sbr.rel (0) target = $region61
    $region60: #{tpu_custom_call.1} parent=1 // pred_region
      %387 = vsyncadd [#allocation4], 0
      %s388 = sshll.u32 [#allocation11], 4
      %s389 = int_to_ptr.vmem [resolvable:$true] %s388
      %s390 = sshll.u32 %s9, 4
      %s391 = int_to_ptr.hbm [resolvable:$true] %s390
      %396 = dma.vmem_to_hbm [thread:$0]  %s389, 256, %s391, [#allocation4], 128, 128, 8
    $region61: #{tpu_custom_call.1} parent=1 // pred_fallthru
      _
    // Predicated region
    $region62: #{tpu_custom_call.1} parent=1 // pred_check
      _
    $region63: #{tpu_custom_call.1} parent=1 // pred_check_branch
      %398 = sbr.rel (0) target = $region65
    $region64: #{tpu_custom_call.1} parent=1 // pred_region
      %400 = vsyncadd [#allocation13], 0
      %s401 = sshll.u32 [#allocation12], 4
      %s402 = int_to_ptr.vmem [resolvable:$true] %s401
      %s403 = sshll.u32 %s10, 4
      %s404 = int_to_ptr.hbm [resolvable:$true] %s403
      %409 = dma.vmem_to_hbm [thread:$0]  %s402, 256, %s404, [#allocation13], 128, 128, 8
    $region65: #{tpu_custom_call.1} parent=1 // pred_fallthru
      _
    // Predicated region
    $region66: #{tpu_custom_call.1} parent=1 // pred_check
      _
    $region67: #{tpu_custom_call.1} parent=1 // pred_check_branch
      %411 = sbr.rel (0) target = $region69
    $region68: #{tpu_custom_call.1} parent=1 // pred_region
      %413 = dma.done [#allocation4], 256
    $region69: #{tpu_custom_call.1} parent=1 // pred_fallthru
      _
    // Predicated region
    $region70: #{tpu_custom_call.1} parent=1 // pred_check
      _
    $region71: #{tpu_custom_call.1} parent=1 // pred_check_branch
      %415 = sbr.rel (0) target = $region73
    $region72: #{tpu_custom_call.1} parent=1 // pred_region
      %417 = dma.done [#allocation13], 256
    $region73: #{tpu_custom_call.1} parent=1 // pred_fallthru
      _
    %418 = vsyncpa [#allocation3], 1
    %419 = vsyncpa [#allocation6], 1
    %420 = vsyncpa [#allocation9], 1
    %421 = vsyncpa [#allocation4], 1
    %422 = vsyncpa [#allocation13], 1

</llo_original>
